<compile_context>
chip_gen: v7x
topology: tpu7x:2x2x1
jax: 0.10.0
libtpu: 0.0.40
codegen_flags: <defaults>
</compile_context>

<pallas_src>
import functools
import math

import jax
import jax.numpy as jnp
from jax.experimental import pallas as pl
from jax.experimental.pallas import tpu as pltpu


ROW_TILE = 256                       # rows of (B*S) per grid step (256 suits v6e/v7x MXU)
VOCAB_TILE = 512                     # vocab columns per grid step in the final projection
VMEM_LIMIT_BYTES = 48 * 1024 * 1024  # explicit budget, headroom under v7x's 64 MiB VMEM
NEG_INF = -1e30                      # additive mask value (finite to avoid NaN rows)
LN_EPS = 1e-5


def _bf16(x):
    return x.astype(jnp.bfloat16)


def _compiler_params(sem):
    return pltpu.CompilerParams(dimension_semantics=sem,
                                vmem_limit_bytes=VMEM_LIMIT_BYTES)


def _row_tile(n):
    return min(ROW_TILE, n)


def _pad_rows(x, tile):
    pad = (-x.shape[0]) % tile
    if pad:
        x = jnp.pad(x, ((0, pad),) + ((0, 0),) * (x.ndim - 1))
    return x


# ----------------------------------------------------------------------------
# Pallas kernels
# ----------------------------------------------------------------------------

def _fused_linear_kernel(x_ref, w_ref, b_ref, o_ref):
    o_ref[...] = (
        jnp.dot(_bf16(x_ref[...]), w_ref[...],
                preferred_element_type=jnp.float32)
        + b_ref[...]
    )


def _proj_add_ln_mask_kernel(x_ref, w_ref, b_ref, r_ref, g_ref, bt_ref, m_ref,
                             o_ref, *, eps):
    # LayerNorm(res + (x @ W + b)) * pad_mask, fused.
    y = (jnp.dot(_bf16(x_ref[...]), w_ref[...],
                 preferred_element_type=jnp.float32)
         + b_ref[...] + r_ref[...])
    mu = jnp.mean(y, axis=-1, keepdims=True)
    yc = y - mu
    var = jnp.mean(yc * yc, axis=-1, keepdims=True)
    o_ref[...] = (yc * jax.lax.rsqrt(var + eps) * g_ref[...] + bt_ref[...]) \
        * m_ref[...]


def _ffn_ln_mask_kernel(x_ref, w1_ref, b1_ref, w2_ref, b2_ref, g_ref, bt_ref,
                        m_ref, o_ref, *, eps):
    # LayerNorm(x + fc2(relu(fc1(x)))) * pad_mask, fused.
    x = x_ref[...]
    hmid = jnp.maximum(
        jnp.dot(_bf16(x), w1_ref[...], preferred_element_type=jnp.float32)
        + b1_ref[...], 0.0)
    y = (jnp.dot(_bf16(hmid), w2_ref[...], preferred_element_type=jnp.float32)
         + b2_ref[...] + x)
    mu = jnp.mean(y, axis=-1, keepdims=True)
    yc = y - mu
    var = jnp.mean(yc * yc, axis=-1, keepdims=True)
    o_ref[...] = (yc * jax.lax.rsqrt(var + eps) * g_ref[...] + bt_ref[...]) \
        * m_ref[...]


def _attn_kernel(q_ref, k_ref, v_ref, bias_ref, o_ref, *, h, dk, dv, scale,
                 causal):
    # Packed-head attention for one batch element.
    # q_ref: (1, Sq, h*dk), k_ref: (1, Sk, h*dk), v_ref: (1, Sk, h*dv),
    # bias_ref: (1, 1, Sk) additive key-pad bias (0 or NEG_INF).
    q = q_ref[0]
    k = k_ref[0]
    v = v_ref[0]
    kb = bias_ref[0]                      # (1, Sk)
    sq, sk = q.shape[0], k.shape[0]

    if causal:
        row = jax.lax.broadcasted_iota(jnp.int32, (sq, sk), 0)
        col = jax.lax.broadcasted_iota(jnp.int32, (sq, sk), 1)
        causal_bias = jnp.where(col > row, NEG_INF, 0.0).astype(jnp.float32)

    outs = []
    for hd in range(h):                   # static unrolled loop over heads
        q_h = _bf16(q[:, hd * dk:(hd + 1) * dk] * scale)   # scale folded into Q
        k_h = _bf16(k[:, hd * dk:(hd + 1) * dk])
        v_h = _bf16(v[:, hd * dv:(hd + 1) * dv])
        s = jax.lax.dot_general(q_h, k_h, (((1,), (1,)), ((), ())),
                                preferred_element_type=jnp.float32)
        s = s + kb
        if causal:
            s = s + causal_bias
        m = jnp.max(s, axis=-1, keepdims=True)
        p = jnp.exp(s - m)
        l = jnp.sum(p, axis=-1, keepdims=True)
        o_h = jnp.dot(_bf16(p), v_h, preferred_element_type=jnp.float32)
        outs.append(o_h * pl.reciprocal(l, approx=True))
    o_ref[0] = jnp.concatenate(outs, axis=-1)


def _logits_lse_kernel(x_ref, w_ref, z_ref, lse_ref, m_sc, l_sc, *,
                       vt, v_valid, mask_cols):
    # Row/vocab-tiled logits + online log-sum-exp (vocab axis is the reduction).
    j = pl.program_id(1)

    @pl.when(j == 0)
    def _():
        m_sc[...] = jnp.full_like(m_sc, -jnp.inf)
        l_sc[...] = jnp.zeros_like(l_sc)

    z = jnp.dot(_bf16(x_ref[...]), w_ref[...],
                preferred_element_type=jnp.float32)
    if mask_cols:
        col = j * vt + jax.lax.broadcasted_iota(jnp.int32, z.shape, 1)
        z = jnp.where(col < v_valid, z, NEG_INF)
    z_ref[...] = z

    m_prev = m_sc[...]
    m_new = jnp.maximum(m_prev, jnp.max(z, axis=-1, keepdims=True))
    l_sc[...] = (l_sc[...] * jnp.exp(m_prev - m_new)
                 + jnp.sum(jnp.exp(z - m_new), axis=-1, keepdims=True))
    m_sc[...] = m_new

    @pl.when(j == pl.num_programs(1) - 1)
    def _():
        lse_ref[...] = m_sc[...] + jnp.log(l_sc[...])


def _sub_lse_kernel(z_ref, lse_ref, o_ref):
    o_ref[...] = z_ref[...] - lse_ref[...]


# ----------------------------------------------------------------------------
# pallas_call wrappers
# ----------------------------------------------------------------------------

def fused_linear(x2d, w, b):
    """x2d: (N, Din) f32, w: (Din, Dout) bf16, b: (1, Dout) f32 -> (N, Dout) f32."""
    n, din = x2d.shape
    dout = w.shape[1]
    rt = _row_tile(n)
    xp = _pad_rows(x2d, rt)
    np_ = xp.shape[0]
    out = pl.pallas_call(
        _fused_linear_kernel,
        out_shape=jax.ShapeDtypeStruct((np_, dout), jnp.float32),
        grid=(np_ // rt,),
        in_specs=[
            pl.BlockSpec((rt, din), lambda i: (i, 0)),
            pl.BlockSpec((din, dout), lambda i: (0, 0)),
            pl.BlockSpec((1, dout), lambda i: (0, 0)),
        ],
        out_specs=pl.BlockSpec((rt, dout), lambda i: (i, 0)),
        compiler_params=_compiler_params(("parallel",)),
    )(xp, w, b)
    return out[:n]


def proj_add_ln_mask(x2d, w, b, res2d, gamma, beta, mask2d, eps=LN_EPS):
    """LayerNorm(res + x @ W + b) * mask. x2d: (N, Din), res2d/mask2d: (N, D)/(N, 1)."""
    n, din = x2d.shape
    d = w.shape[1]
    rt = _row_tile(n)
    xp, rp, mp = _pad_rows(x2d, rt), _pad_rows(res2d, rt), _pad_rows(mask2d, rt)
    np_ = xp.shape[0]
    kern = functools.partial(_proj_add_ln_mask_kernel, eps=eps)
    out = pl.pallas_call(
        kern,
        out_shape=jax.ShapeDtypeStruct((np_, d), jnp.float32),
        grid=(np_ // rt,),
        in_specs=[
            pl.BlockSpec((rt, din), lambda i: (i, 0)),
            pl.BlockSpec((din, d), lambda i: (0, 0)),
            pl.BlockSpec((1, d), lambda i: (0, 0)),
            pl.BlockSpec((rt, d), lambda i: (i, 0)),
            pl.BlockSpec((1, d), lambda i: (0, 0)),
            pl.BlockSpec((1, d), lambda i: (0, 0)),
            pl.BlockSpec((rt, 1), lambda i: (i, 0)),
        ],
        out_specs=pl.BlockSpec((rt, d), lambda i: (i, 0)),
        compiler_params=_compiler_params(("parallel",)),
    )(xp, w, b, rp, gamma, beta, mp)
    return out[:n]


def ffn_ln_mask(x2d, w1, b1, w2, b2, gamma, beta, mask2d, eps=LN_EPS):
    """LayerNorm(x + fc2(relu(fc1(x)))) * mask. x2d: (N, D)."""
    n, d = x2d.shape
    dff = w1.shape[1]
    rt = _row_tile(n)
    xp, mp = _pad_rows(x2d, rt), _pad_rows(mask2d, rt)
    np_ = xp.shape[0]
    kern = functools.partial(_ffn_ln_mask_kernel, eps=eps)
    out = pl.pallas_call(
        kern,
        out_shape=jax.ShapeDtypeStruct((np_, d), jnp.float32),
        grid=(np_ // rt,),
        in_specs=[
            pl.BlockSpec((rt, d), lambda i: (i, 0)),
            pl.BlockSpec((d, dff), lambda i: (0, 0)),
            pl.BlockSpec((1, dff), lambda i: (0, 0)),
            pl.BlockSpec((dff, d), lambda i: (0, 0)),
            pl.BlockSpec((1, d), lambda i: (0, 0)),
            pl.BlockSpec((1, d), lambda i: (0, 0)),
            pl.BlockSpec((1, d), lambda i: (0, 0)),
            pl.BlockSpec((rt, 1), lambda i: (i, 0)),
        ],
        out_specs=pl.BlockSpec((rt, d), lambda i: (i, 0)),
        compiler_params=_compiler_params(("parallel",)),
    )(xp, w1, b1, w2, b2, gamma, beta, mp)
    return out[:n]


def sdp_attention_packed(q, k, v, key_bias, *, h, dk, dv, causal):
    """q: (B, Sq, h*dk), k: (B, Sk, h*dk), v: (B, Sk, h*dv), key_bias: (B, 1, Sk)."""
    b, sq, hdk = q.shape
    sk = k.shape[1]
    hdv = v.shape[2]
    kern = functools.partial(_attn_kernel, h=h, dk=dk, dv=dv,
                             scale=1.0 / math.sqrt(dk), causal=causal)
    return pl.pallas_call(
        kern,
        out_shape=jax.ShapeDtypeStruct((b, sq, hdv), jnp.float32),
        grid=(b,),
        in_specs=[
            pl.BlockSpec((1, sq, hdk), lambda i: (i, 0, 0)),
            pl.BlockSpec((1, sk, hdk), lambda i: (i, 0, 0)),
            pl.BlockSpec((1, sk, hdv), lambda i: (i, 0, 0)),
            pl.BlockSpec((1, 1, sk), lambda i: (i, 0, 0)),
        ],
        out_specs=pl.BlockSpec((1, sq, hdv), lambda i: (i, 0, 0)),
        compiler_params=_compiler_params(("parallel",)),
    )(q, k, v, key_bias)


def fc_log_softmax(x2d, w):
    """log_softmax(x @ w, axis=-1), row- and vocab-tiled. x2d: (N, D), w: (D, V) bf16."""
    n, d = x2d.shape
    v_total = w.shape[1]
    rt = _row_tile(n)
    vt = min(VOCAB_TILE, v_total)
    xp = _pad_rows(x2d, rt)
    np_ = xp.shape[0]
    pad_v = (-v_total) % vt
    wp = jnp.pad(w, ((0, 0), (0, pad_v))) if pad_v else w
    vp = v_total + pad_v
    grid = (np_ // rt, vp // vt)

    kern = functools.partial(_logits_lse_kernel, vt=vt, v_valid=v_total,
                             mask_cols=(pad_v > 0))
    logits, lse = pl.pallas_call(
        kern,
        out_shape=(jax.ShapeDtypeStruct((np_, vp), jnp.float32),
                   jax.ShapeDtypeStruct((np_, 1), jnp.float32)),
        grid=grid,
        in_specs=[
            pl.BlockSpec((rt, d), lambda i, j: (i, 0)),
            pl.BlockSpec((d, vt), lambda i, j: (0, j)),
        ],
        out_specs=[
            pl.BlockSpec((rt, vt), lambda i, j: (i, j)),
            pl.BlockSpec((rt, 1), lambda i, j: (i, 0)),
        ],
        scratch_shapes=[pltpu.VMEM((rt, 1), jnp.float32),
                        pltpu.VMEM((rt, 1), jnp.float32)],
        compiler_params=_compiler_params(("parallel", "arbitrary")),
    )(xp, wp)

    out = pl.pallas_call(
        _sub_lse_kernel,
        out_shape=jax.ShapeDtypeStruct((np_, vp), jnp.float32),
        grid=grid,
        in_specs=[
            pl.BlockSpec((rt, vt), lambda i, j: (i, j)),
            pl.BlockSpec((rt, 1), lambda i, j: (i, 0)),
        ],
        out_specs=pl.BlockSpec((rt, vt), lambda i, j: (i, j)),
        compiler_params=_compiler_params(("parallel", "parallel")),
    )(logits, lse)
    return out[:n, :v_total]


# ----------------------------------------------------------------------------
# Model (forward semantics of TransformerDecoder_LRP, eval mode)
# ----------------------------------------------------------------------------

def mha_self(p, x2d, b, s, key_bias, h, d_k, d_v):
    hdk, hdv = h * d_k, h * d_v
    qkv = fused_linear(x2d, p["w_qkv"], p["b_qkv"])          # one fused matmul
    q = qkv[:, :hdk].reshape(b, s, hdk)
    k = qkv[:, hdk:2 * hdk].reshape(b, s, hdk)
    v = qkv[:, 2 * hdk:].reshape(b, s, hdv)
    att = sdp_attention_packed(q, k, v, key_bias, h=h, dk=d_k, dv=d_v,
                               causal=True)
    return att.reshape(b * s, hdv)


def mha_cross(p, q2d, enc2d, b, sq, sk, key_bias, h, d_k, d_v):
    hdk, hdv = h * d_k, h * d_v
    q = fused_linear(q2d, p["wq"], p["bq"]).reshape(b, sq, hdk)
    kv = fused_linear(enc2d, p["w_kv"], p["b_kv"])           # fused K|V matmul
    k = kv[:, :hdk].reshape(b, sk, hdk)
    v = kv[:, hdk:].reshape(b, sk, hdv)
    att = sdp_attention_packed(q, k, v, key_bias, h=h, dk=d_k, dv=d_v,
                               causal=False)
    return att.reshape(b * sq, hdv)


def decoder_layer(lp, x2d, enc2d, mask_rows, self_key_bias, enc_key_bias,
                  b, s, se, h, d_k, d_v):
    # self-attention block: attention -> fused proj+residual+LN+mask
    sa = mha_self(lp["self_att"], x2d, b, s, self_key_bias, h, d_k, d_v)
    x1 = proj_add_ln_mask(sa, lp["self_att"]["wo"], lp["self_att"]["bo"], x2d,
                          lp["ln1_g"], lp["ln1_b"], mask_rows)
    # cross-attention block
    ea = mha_cross(lp["enc_att"], x1, enc2d, b, s, se, enc_key_bias, h, d_k, d_v)
    x2 = proj_add_ln_mask(ea, lp["enc_att"]["wo"], lp["enc_att"]["bo"], x1,
                          lp["ln2_g"], lp["ln2_b"], mask_rows)
    # position-wise FFN fused with residual+LN, then pad mask
    x3 = ffn_ln_mask(x2, lp["ff_w1"], lp["ff_b1"], lp["ff_w2"], lp["ff_b2"],
                     lp["ln3_g"], lp["ln3_b"], mask_rows)
    return x3


def transformer_decoder_lrp_forward(params, input_ids, enc_output, mask_encoder,
                                    *, padding_idx, h, d_k, d_v):
    b, s = input_ids.shape
    se = enc_output.shape[1]
    d = params["word_emb"].shape[1]

    # pad mask for queries (multiplies activations), (B*S, 1)
    mask_rows = (input_ids != padding_idx).astype(jnp.float32).reshape(b * s, 1)
    # additive key-pad biases (causal triangle is generated inside the kernel)
    self_key_bias = jnp.where(input_ids == padding_idx, NEG_INF, 0.0) \
        .astype(jnp.float32)[:, None, :]                                 # (B,1,S)
    enc_key_bias = jnp.where(mask_encoder.reshape(b, 1, se).astype(bool),
                             NEG_INF, 0.0).astype(jnp.float32)           # (B,1,Se)

    seq = jnp.broadcast_to(jnp.arange(1, s + 1, dtype=jnp.int32)[None, :], (b, s))
    seq = jnp.where(input_ids == padding_idx, 0, seq)

    # embedding gathers stay in plain JAX (Pallas would need a DMA-gather kernel)
    out = params["word_emb"][input_ids] + params["pos_emb"][seq]         # (B,S,D)
    x2d = out.reshape(b * s, d)
    enc2d = enc_output.reshape(b * se, d)

    for lp in params["layers"]:
        x2d = decoder_layer(lp, x2d, enc2d, mask_rows, self_key_bias,
                            enc_key_bias, b, s, se, h, d_k, d_v)

    logp = fc_log_softmax(x2d, params["fc_w"])                            # (B*S,V)
    return logp.reshape(b, s, -1)


# ----------------------------------------------------------------------------
# Deterministic parameter init (weights stored bf16 for the MXU matmuls)
# ----------------------------------------------------------------------------

def sinusoid_encoding_table(n_position, d_hid, padding_idx=None):
    pos = jnp.arange(n_position, dtype=jnp.float32)[:, None]
    hid = jnp.arange(d_hid)
    angle = pos / jnp.power(10000.0, (2.0 * (hid // 2)) / d_hid)
    table = jnp.where(hid % 2 == 0, jnp.sin(angle), jnp.cos(angle))
    if padding_idx is not None:
        table = table.at[padding_idx].set(0.0)
    return table.astype(jnp.float32)


class _KeyGen:
    def __init__(self, key):
        self.key = key

    def __call__(self):
        self.key, sub = jax.random.split(self.key)
        return sub


def _init_mha_self(kg, d_model, d_k, d_v, h, scale=0.02):
    wq = scale * jax.random.normal(kg(), (d_model, h * d_k), jnp.float32)
    wk = scale * jax.random.normal(kg(), (d_model, h * d_k), jnp.float32)
    wv = scale * jax.random.normal(kg(), (d_model, h * d_v), jnp.float32)
    wo = scale * jax.random.normal(kg(), (h * d_v, d_model), jnp.float32)
    return {
        "w_qkv": _bf16(jnp.concatenate([wq, wk, wv], axis=1)),
        "b_qkv": jnp.zeros((1, 2 * h * d_k + h * d_v), jnp.float32),
        "wo": _bf16(wo),
        "bo": jnp.zeros((1, d_model), jnp.float32),
    }


def _init_mha_cross(kg, d_model, d_k, d_v, h, scale=0.02):
    wq = scale * jax.random.normal(kg(), (d_model, h * d_k), jnp.float32)
    wk = scale * jax.random.normal(kg(), (d_model, h * d_k), jnp.float32)
    wv = scale * jax.random.normal(kg(), (d_model, h * d_v), jnp.float32)
    wo = scale * jax.random.normal(kg(), (h * d_v, d_model), jnp.float32)
    return {
        "wq": _bf16(wq),
        "bq": jnp.zeros((1, h * d_k), jnp.float32),
        "w_kv": _bf16(jnp.concatenate([wk, wv], axis=1)),
        "b_kv": jnp.zeros((1, h * d_k + h * d_v), jnp.float32),
        "wo": _bf16(wo),
        "bo": jnp.zeros((1, d_model), jnp.float32),
    }


def init_params(key, *, vocab_size, max_len, N_dec, padding_idx,
                d_model, d_k, d_v, h, d_ff, scale=0.02):
    kg = _KeyGen(key)
    word_emb = scale * jax.random.normal(kg(), (vocab_size, d_model), jnp.float32)
    word_emb = word_emb.at[padding_idx].set(0.0)
    pos_emb = sinusoid_encoding_table(max_len + 1, d_model, padding_idx=0)

    layers = []
    for _ in range(N_dec):
        layers.append({
            "self_att": _init_mha_self(kg, d_model, d_k, d_v, h, scale),
            "enc_att": _init_mha_cross(kg, d_model, d_k, d_v, h, scale),
            "ln1_g": jnp.ones((1, d_model), jnp.float32),
            "ln1_b": jnp.zeros((1, d_model), jnp.float32),
            "ln2_g": jnp.ones((1, d_model), jnp.float32),
            "ln2_b": jnp.zeros((1, d_model), jnp.float32),
            "ff_w1": _bf16(scale * jax.random.normal(kg(), (d_model, d_ff), jnp.float32)),
            "ff_b1": jnp.zeros((1, d_ff), jnp.float32),
            "ff_w2": _bf16(scale * jax.random.normal(kg(), (d_ff, d_model), jnp.float32)),
            "ff_b2": jnp.zeros((1, d_model), jnp.float32),
            "ln3_g": jnp.ones((1, d_model), jnp.float32),
            "ln3_b": jnp.zeros((1, d_model), jnp.float32),
        })

    fc_w = _bf16(scale * jax.random.normal(kg(), (d_model, vocab_size), jnp.float32))

    return {"word_emb": word_emb, "pos_emb": pos_emb, "layers": layers,
            "fc_w": fc_w}


# ----------------------------------------------------------------------------
# Main
# ----------------------------------------------------------------------------

if __name__ == "__main__":
    # small-shape config consistent with the module
    vocab_size, max_len, N_dec, padding_idx = 50, 20, 2, 0
    d_model, d_k, d_v, h, d_ff = 32, 8, 8, 4, 64
    B, S, Se = 2, 8, 16

    key = jax.random.PRNGKey(0)
    k_par, k_tok, k_enc = jax.random.split(key, 3)

    params = init_params(
        k_par, vocab_size=vocab_size, max_len=max_len, N_dec=N_dec,
        padding_idx=padding_idx, d_model=d_model, d_k=d_k, d_v=d_v, h=h,
        d_ff=d_ff)

    input_ids = jax.random.randint(k_tok, (B, S), 1, vocab_size, dtype=jnp.int32)
    input_ids = input_ids.at[1, -2:].set(padding_idx)          # some padding
    enc_output = jax.random.normal(k_enc, (B, Se, d_model), jnp.float32)
    mask_encoder = jnp.zeros((B, 1, 1, Se), dtype=bool)
    mask_encoder = mask_encoder.at[0, 0, 0, -3:].set(True)     # mask some enc positions

    # TODO(synk): stateful beam-search buffers (running_mask_self_attention,
    # running_seq) are not modeled; this is the non-stateful training/eval path.

    out = transformer_decoder_lrp_forward(
        params, input_ids, enc_output, mask_encoder,
        padding_idx=padding_idx, h=h, d_k=d_k, d_v=d_v)
    out = jax.block_until_ready(out)

    assert out.shape == (B, S, vocab_size)
    assert bool(jnp.all(jnp.isfinite(out)))
    # log_softmax rows should (exp-)sum to 1
    assert bool(jnp.allclose(jnp.sum(jnp.exp(out), axis=-1), 1.0, atol=1e-4))

    print("KERNEL_OK")
</pallas_src>

<mosaic_0001>
module attributes {stable_mosaic.version = 11 : i64} {
  func.func @_fused_linear_kernel(%arg0: i32, %arg1: memref<16x32xf32, #tpu.memory_space<vmem>>, %arg2: memref<32x96xbf16, #tpu.memory_space<vmem>>, %arg3: memref<1x96xf32, #tpu.memory_space<vmem>>, %arg4: memref<16x96xf32, #tpu.memory_space<vmem>>) attributes {dimension_semantics = [#tpu.dimension_semantics<parallel>], iteration_bounds = array<i64: 1>, scalar_prefetch = 0 : i64, scratch_operands = 0 : i64, tpu.core_type = #tpu.core_type<tc>, window_params = [{transform_indices = @transform_0, window_bounds = array<i64: 16, 32>}, {pipeline_mode = #tpu.pipeline_mode<synchronous>, transform_indices = @transform_1, window_bounds = array<i64: 32, 96>}, {pipeline_mode = #tpu.pipeline_mode<synchronous>, transform_indices = @transform_2, window_bounds = array<i64: 1, 96>}, {transform_indices = @transform_3, window_bounds = array<i64: 16, 96>}]} {
    %c0 = arith.constant 0 : index
    %c0_0 = arith.constant 0 : index
    %0 = vector.load %arg1[%c0, %c0_0] : memref<16x32xf32, #tpu.memory_space<vmem>>, vector<16x32xf32>
    %1 = arith.truncf %0 : vector<16x32xf32> to vector<16x32xbf16>
    %c0_1 = arith.constant 0 : index
    %c0_2 = arith.constant 0 : index
    %2 = vector.load %arg2[%c0_1, %c0_2] : memref<32x96xbf16, #tpu.memory_space<vmem>>, vector<32x96xbf16>
    %cst = arith.constant dense<0.000000e+00> : vector<16x96xf32>
    %3 = tpu.matmul %1, %2, %cst {dimension_numbers = #tpu.dot_dimension_numbers<[1], [0], [0], [1], [0, 0, 1, 1], [], []>} : vector<16x32xbf16>, vector<32x96xbf16>, vector<16x96xf32> -> vector<16x96xf32>
    %c0_3 = arith.constant 0 : index
    %c0_4 = arith.constant 0 : index
    %4 = vector.load %arg3[%c0_3, %c0_4] : memref<1x96xf32, #tpu.memory_space<vmem>>, vector<1x96xf32>
    %5 = vector.broadcast %4 : vector<1x96xf32> to vector<16x96xf32>
    %6 = arith.addf %3, %5 : vector<16x96xf32>
    %c0_5 = arith.constant 0 : index
    %c0_6 = arith.constant 0 : index
    %7 = vector.load %arg4[%c0_5, %c0_6] : memref<16x96xf32, #tpu.memory_space<vmem>>, vector<16x96xf32>
    tpu.vector_store %arg4[%c0_5, %c0_6], %6 {strides = array<i32>} : memref<16x96xf32, #tpu.memory_space<vmem>>, vector<16x96xf32>,
    return
  }
  func.func @transform_0(%arg0: i32) -> (i32, i32) {
    %c0_i32 = arith.constant 0 : i32
    %c0_i32_0 = arith.constant 0 : i32
    return %arg0, %c0_i32 : i32, i32
  }
  func.func @transform_1(%arg0: i32) -> (i32, i32) {
    %c0_i32 = arith.constant 0 : i32
    %c0_i32_0 = arith.constant 0 : i32
    %c0_i32_1 = arith.constant 0 : i32
    return %c0_i32, %c0_i32_0 : i32, i32
  }
  func.func @transform_2(%arg0: i32) -> (i32, i32) {
    %c0_i32 = arith.constant 0 : i32
    %c0_i32_0 = arith.constant 0 : i32
    %c0_i32_1 = arith.constant 0 : i32
    return %c0_i32, %c0_i32_0 : i32, i32
  }
  func.func @transform_3(%arg0: i32) -> (i32, i32) {
    %c0_i32 = arith.constant 0 : i32
    %c0_i32_0 = arith.constant 0 : i32
    return %arg0, %c0_i32 : i32, i32
  }
}

</mosaic_0001>

<llo_original>
// kernel: tpu_custom_call.1
$region0: #{tpu_custom_call.1}
  #allocation0 [shape = 'u32[]', space=smem, size = 0x4, offset = 0x4, fixed_abs, tag = 'smem constant byte address 0x4 - core index']
  #allocation1 [shape = 'u32[144,128]{1,0:T(1,128)}', space=vmem, size = 0x12000, scoped, tag = 'internal scratch']
  %s0 = inlined_call_operand.hbm [shape: f32[16,32], index: 0, kind: input, shape index: {}]
  %s1 = inlined_call_operand.hbm [shape: bf16[32,96], index: 1, kind: input, shape index: {}]
  %s2 = inlined_call_operand.vmem [shape: f32[1,96], index: 2, kind: input, shape index: {}]
  %s3 = inlined_call_operand.hbm [shape: f32[16,96], index: 3, kind: output, shape index: {}]
  %s4 = sld [smem:[#allocation0]]
  $region30: #{tpu_custom_call.1} parent=0
    _
  %s6 = ssub.s32 1, %s4
  %s7 = scalar_select 0, %s6, %s4
  $region1: #{tpu_custom_call.1} parent=0
    #allocation2 [shape = 'u8[8192]{0}', space=vmem, size = 0x2000, scoped, tag = 'input window, operand 0, single buffered']
    #allocation3 [shape = 's32[1]{0}', space=sflag, size = 0x4, scoped, tag = 'scoped memory for tpu_custom_call.1']
    #allocation4 [shape = 's32[1]{0}', space=sflag, size = 0x4, scoped, tag = 'scoped memory for tpu_custom_call.1']
    #allocation5 [shape = 'u8[8192]{0}', space=vmem, size = 0x2000, scoped, tag = 'input window, operand 1, single buffered']
    #allocation6 [shape = 's32[1]{0}', space=sflag, size = 0x4, scoped, tag = 'scoped memory for tpu_custom_call.1']
    #allocation7 [shape = 'u8[8192]{0}', space=vmem, size = 0x2000, scoped, tag = 'output window, operand 0, single buffered']
    %8 = vsyncpa [#allocation3], 0
    %9 = vsyncpa [#allocation6], 0
    %10 = vsyncpa [#allocation4], 0
    // Predicated region
    $region2: #{tpu_custom_call.1} parent=1 // pred_check
      _
    $region3: #{tpu_custom_call.1} parent=1 // pred_check_branch
      %12 = sbr.rel (0) target = $region5
    $region4: #{tpu_custom_call.1} parent=1 // pred_region
      %s14 = ssub.s32 256, 256
      %15 = vsyncadd [#allocation3], %s14
      %s16 = sshll.u32 [#allocation2], 4
      %s17 = int_to_ptr.vmem [resolvable:$true] %s16
      %22 = dma.hbm_to_vmem [thread:$0]  %s0, 256, %s17, [#allocation3], 128, 128, 8
    $region5: #{tpu_custom_call.1} parent=1 // pred_fallthru
      _
    // Predicated region
    $region6: #{tpu_custom_call.1} parent=1 // pred_check
      _
    $region7: #{tpu_custom_call.1} parent=1 // pred_check_branch
      %24 = sbr.rel (0) target = $region9
    $region8: #{tpu_custom_call.1} parent=1 // pred_region
      %s26 = ssub.s32 256, 256
      %27 = vsyncadd [#allocation6], %s26
      %s28 = sshll.u32 [#allocation5], 4
      %s29 = int_to_ptr.vmem [resolvable:$true] %s28
      %34 = dma.hbm_to_vmem [thread:$0]  %s1, 256, %s29, [#allocation6], 64, 64, 4
    $region9: #{tpu_custom_call.1} parent=1 // pred_fallthru
      _
    // Predicated region
    $region10: #{tpu_custom_call.1} parent=1 // pred_check
      _
    $region11: #{tpu_custom_call.1} parent=1 // pred_check_branch
      %36 = sbr.rel (0) target = $region13
    $region12: #{tpu_custom_call.1} parent=1 // pred_region
      _
    $region13: #{tpu_custom_call.1} parent=1 // pred_fallthru
      _
    // Predicated region
    $region14: #{tpu_custom_call.1} parent=1 // pred_check
      _
    $region15: #{tpu_custom_call.1} parent=1 // pred_check_branch
      %38 = sbr.rel (0) target = $region17
    $region16: #{tpu_custom_call.1} parent=1 // pred_region
      %39 = dma.done [#allocation3], 256
    $region17: #{tpu_custom_call.1} parent=1 // pred_fallthru
      _
    // Predicated region
    $region18: #{tpu_custom_call.1} parent=1 // pred_check
      _
    $region19: #{tpu_custom_call.1} parent=1 // pred_check_branch
      %41 = sbr.rel (0) target = $region21
    $region20: #{tpu_custom_call.1} parent=1 // pred_region
      %42 = dma.done [#allocation6], 256
    $region21: #{tpu_custom_call.1} parent=1 // pred_fallthru
      _
    %v44 = vld [vmem:[#allocation2] sm:$0xff]
    %v45 = vld [vmem:[#allocation2 + $0x8] sm:$0xff]
    %v46 = vpack.c.bf16 %v45, %v44
    %v47 = vld [vmem:[#allocation5] sm:$0xf]
    %v48 = vld [vmem:[#allocation5 + $0x4] sm:$0xf]
    %v49 = vld [vmem:[#allocation5 + $0x8] sm:$0xf]
    %v50 = vld [vmem:[#allocation5 + $0xc] sm:$0xf]
    %v51 = vld [vmem:[%s2] sm:$0x1]
    %v53 = vlaneseq
    %v54 = vshrl.u32 %v53, 7
    %v55 = vsub.s32 0, %v54
    %v56 = vrot.slane %v51, %v55
    %v62 = vunpack.c.l.b16 %v47
    %v63 = vunpack.c.l.b16 %v48
    %v64 = vunpack.c.l.b16 %v49
    %v65 = vunpack.c.l.b16 %v50
    %v66 = vpack.c.b16 %v63, %v62
    %v67 = vpack.c.b16 %v65, %v64
    %vm70 = vcmask 261120
    %v72 = vsel %vm70, %v46, 0
    %74 = vmatprep.subr.bf16.mxu0 0
    %75 = vmatpush1.bf16.msra.mxu0 %v66
    %76 = vmatprep.subr.bf16.mxu0 0
    %77 = vmatpush1.bf16.msra.mxu0 %v67
    %78 = vmatprep.subr.bf16.mxu0 0
    %79 = vmatpush1.bf16.msra.mxu0 0
    %80 = vmatprep.subr.bf16.mxu0 0
    %81 = vmatpush1.bf16.msra.mxu0 0
    %82 = vmatprep.subr.bf16.mxu0 0
    %83 = vmatpush1.bf16.msra.mxu0 0
    %84 = vmatprep.subr.bf16.mxu0 0
    %85 = vmatpush1.bf16.msra.mxu0 0
    %86 = vmatprep.subr.bf16.mxu0 0
    %87 = vmatpush1.bf16.msra.mxu0 0
    %88 = vmatprep.subr.bf16.mxu0 0
    %89 = vmatpush1.bf16.msra.mxu0 0
    %90 = vmatprep.subr.bf16.mxu0 0
    %91 = vmatpush1.bf16.msra.mxu0 0
    %92 = vmatprep.subr.bf16.mxu0 0
    %93 = vmatpush1.bf16.msra.mxu0 0
    %94 = vmatprep.subr.bf16.mxu0 0
    %95 = vmatpush1.bf16.msra.mxu0 0
    %96 = vmatprep.subr.bf16.mxu0 0
    %97 = vmatpush1.bf16.msra.mxu0 0
    %98 = vmatprep.subr.bf16.mxu0 0
    %99 = vmatpush1.bf16.msra.mxu0 0
    %100 = vmatprep.subr.bf16.mxu0 0
    %101 = vmatpush1.bf16.msra.mxu0 0
    %102 = vmatprep.subr.bf16.mxu0 0
    %103 = vmatpush1.bf16.msra.mxu0 0
    %104 = vmatprep.subr.bf16.mxu0 0
    %105 = vmatpush1.bf16.msra.mxu0 0
    %106 = vmatprep.mubr.bf16.mxu0 0
    %107 = vmatmul.mubr.bf16.gmra.mrb[0].mxu0 %v72
    %v108 = vpop.f32.mrb[0].mxu0
    %v109 = vadd.f32 %v56, %v108
    %v110 = vpop.f32.mrb[0].mxu0
    %v111 = vpop.f32.mrb[0].mxu0
    %v112 = vadd.f32 %v56, %v111
    %v113 = vpop.f32.mrb[0].mxu0
    %114 = vdwg.mxu0
    %vm115 = vcmask 785408
    %116 = vst.msk [vmem:[#allocation7] sm:$0xff] %vm115, %v109
    %117 = vst.msk [vmem:[#allocation7 + $0x8] sm:$0xff] %vm115, %v112
    // Predicated region
    $region22: #{tpu_custom_call.1} parent=1 // pred_check
      _
    $region23: #{tpu_custom_call.1} parent=1 // pred_check_branch
      %119 = sbr.rel (0) target = $region25
    $region24: #{tpu_custom_call.1} parent=1 // pred_region
      %s121 = ssub.s32 256, 256
      %122 = vsyncadd [#allocation4], %s121
      %s123 = sshll.u32 [#allocation7], 4
      %s124 = int_to_ptr.vmem [resolvable:$true] %s123
      %129 = dma.vmem_to_hbm [thread:$0]  %s124, 256, %s3, [#allocation4], 128, 128, 8
    $region25: #{tpu_custom_call.1} parent=1 // pred_fallthru
      _
    // Predicated region
    $region26: #{tpu_custom_call.1} parent=1 // pred_check
      _
    $region27: #{tpu_custom_call.1} parent=1 // pred_check_branch
      %131 = sbr.rel (0) target = $region29
    $region28: #{tpu_custom_call.1} parent=1 // pred_region
      %132 = dma.done [#allocation4], 256
    $region29: #{tpu_custom_call.1} parent=1 // pred_fallthru
      _
    %133 = vsyncpa [#allocation3], 1
    %134 = vsyncpa [#allocation6], 1
    %135 = vsyncpa [#allocation4], 1

</llo_original>
